<compile_context>
chip_gen: v7x
topology: tpu7x:2x2x1
jax: 0.10.0
libtpu: 0.0.40
codegen_flags: <defaults>
</compile_context>

<pallas_src>
import math

import jax
import jax.numpy as jnp
from jax.experimental import pallas as pl
from jax.experimental.pallas import tpu as pltpu

WEIGHT_REGULARIZER = 1e-06
DROPOUT_REGULARIZER = 1e-05
INIT_MIN = 0.1
INIT_MAX = 0.1

_EPS = 1e-07
_TEMP = 0.1  # fixed in the PyTorch module


# ---------------------------------------------------------------------------
# Pass 1: concrete-dropout mask (elementwise), scaled by 1/(1-p), cast to bf16.
# Computed once per x element; grid (M tiles, K tiles), fully parallel.
# ---------------------------------------------------------------------------
def _concrete_dropout_mask_kernel(scal_ref, x_ref, u_ref, xm_ref):
    A = scal_ref[0]           # ((p+eps)/(1-p+eps)) ** (1/temp) == exp(logit(p)/temp)
    inv_retain = scal_ref[1]  # 1 / (1 - p)

    u = u_ref[...]
    a = u + _EPS
    b = (1.0 - u) + _EPS
    # a**10 / b**10 via repeated squaring (4 VPU muls each).
    a2 = a * a
    a4 = a2 * a2
    a5 = a4 * a
    a10 = a5 * a5
    b2 = b * b
    b4 = b2 * b2
    b5 = b4 * b
    b10 = b5 * b5
    # keep = 1 - sigmoid((logit(p) + logit(u)) / temp); exact algebra, one divide.
    # (u -> 0 gives keep -> 1, u -> 1 gives keep -> 0; denominator cannot vanish
    #  for non-degenerate p such as the module's init p = 0.1.)
    keep = b10 / (b10 + A * a10)
    xm_ref[...] = (x_ref[...] * (keep * inv_retain)).astype(xm_ref.dtype)


# ---------------------------------------------------------------------------
# Pass 2: tiled matmul + bias. bf16 operands, f32 VMEM accumulator over K.
# ---------------------------------------------------------------------------
def _linear_bias_kernel(x_ref, w_ref, b_ref, out_ref, acc_ref):
    k = pl.program_id(2)

    @pl.when(k == 0)
    def _():
        acc_ref[...] = jnp.zeros_like(acc_ref)

    acc_ref[...] += jnp.dot(
        x_ref[...], w_ref[...], preferred_element_type=jnp.float32
    )

    @pl.when(k == pl.num_programs(2) - 1)
    def _():
        out_ref[...] = (acc_ref[...] + b_ref[...]).astype(out_ref.dtype)


def _pick_tile(dim, target, align):
    """Largest multiple of `align` <= target dividing `dim`; else the full dim."""
    t = min(target, (dim // align) * align)
    while t >= align:
        if dim % t == 0:
            return t
        t -= align
    return dim


def concrete_dropout_forward(x, weight, bias, p_logit, *, rng_key,
                             tm=None, tk=None, tn=None):
    """ConcreteDropout + Linear forward. Returns (out, regularization)."""
    batch, d_in = x.shape
    d_out = weight.shape[1]

    # tm 16-aligned (bf16 LHS sublane packing); tk/tn 128-aligned (256+ targets
    # favour the 2x256^2 MXUs of v6e/v7x).
    tm = tm if tm is not None else _pick_tile(batch, 256, 16)
    tk = tk if tk is not None else _pick_tile(d_in, 512, 128)
    tn = tn if tn is not None else _pick_tile(d_out, 512, 128)
    assert batch % tm == 0 and d_in % tk == 0 and d_out % tn == 0

    x = x.astype(jnp.float32)
    weight_f32 = weight.astype(jnp.float32)
    weight_bf16 = weight_f32.astype(jnp.bfloat16)  # cast once; halves W HBM stream
    bias_f32 = bias.astype(jnp.float32)
    bias2d = bias_f32.reshape(1, d_out)

    # Uniform noise (torch.rand_like equivalent), generated once in the wrapper.
    # TODO(synk): on-chip pltpu.prng_* would avoid this HBM read but has no
    # interpret-mode lowering.
    unif_noise = jax.random.uniform(rng_key, (batch, d_in), dtype=jnp.float32)

    # p-derived scalars, computed once; shipped to SMEM via scalar prefetch.
    p = jax.nn.sigmoid(p_logit.reshape(()).astype(jnp.float32))
    retain = 1.0 - p
    logit_p = jnp.log(p + _EPS) - jnp.log(1.0 - p + _EPS)
    A = jnp.exp(logit_p / _TEMP)
    scalars = jnp.stack([A, 1.0 / retain]).astype(jnp.float32)

    # ---- Pass 1: masked, scaled, bf16-cast activations ----------------------
    x_masked = pl.pallas_call(
        _concrete_dropout_mask_kernel,
        out_shape=jax.ShapeDtypeStruct((batch, d_in), jnp.bfloat16),
        grid_spec=pltpu.PrefetchScalarGridSpec(
            num_scalar_prefetch=1,
            grid=(batch // tm, d_in // tk),
            in_specs=[
                pl.BlockSpec((tm, tk), lambda i, k, *_: (i, k)),  # x
                pl.BlockSpec((tm, tk), lambda i, k, *_: (i, k)),  # uniform noise
            ],
            out_specs=pl.BlockSpec((tm, tk), lambda i, k, *_: (i, k)),
        ),
        compiler_params=pltpu.CompilerParams(
            dimension_semantics=("parallel", "parallel"),
            vmem_limit_bytes=64 * 1024 * 1024,
        ),
        cost_estimate=pl.CostEstimate(
            flops=14 * batch * d_in,
            transcendentals=batch * d_in,               # one divide per element
            bytes_accessed=(4 + 4 + 2) * batch * d_in,  # read x,u f32; write bf16
        ),
    )(scalars, x, unif_noise)

    # ---- Pass 2: tiled matmul + bias ----------------------------------------
    grid = (batch // tm, d_out // tn, d_in // tk)
    out = pl.pallas_call(
        _linear_bias_kernel,
        out_shape=jax.ShapeDtypeStruct((batch, d_out), jnp.float32),
        grid_spec=pltpu.PrefetchScalarGridSpec(
            num_scalar_prefetch=0,
            grid=grid,
            in_specs=[
                pl.BlockSpec((tm, tk), lambda i, j, k: (i, k)),  # x_masked (bf16)
                pl.BlockSpec((tk, tn), lambda i, j, k: (k, j)),  # W (bf16)
                pl.BlockSpec((1, tn), lambda i, j, k: (0, j)),   # bias (f32)
            ],
            out_specs=pl.BlockSpec((tm, tn), lambda i, j, k: (i, j)),
            scratch_shapes=[pltpu.VMEM((tm, tn), jnp.float32)],
        ),
        compiler_params=pltpu.CompilerParams(
            dimension_semantics=("parallel", "parallel", "arbitrary"),
            vmem_limit_bytes=64 * 1024 * 1024,
        ),
        cost_estimate=pl.CostEstimate(
            flops=2 * batch * d_in * d_out,
            transcendentals=0,
            bytes_accessed=(
                2 * batch * d_in * (d_out // tn)    # bf16 x re-streamed per N tile
                + 2 * d_in * d_out * (batch // tm)  # bf16 W re-streamed per M tile
                + 4 * d_out
                + 4 * batch * d_out
            ),
        ),
    )(x_masked, weight_bf16, bias2d)

    # Regularizer: tiny plain-JAX reduction, hoisted off the hot path.
    sum_sq = jnp.sum(weight_f32 * weight_f32) + jnp.sum(bias_f32 * bias_f32)
    weights_reg = WEIGHT_REGULARIZER * sum_sq / retain
    dropout_reg = (p * jnp.log(p) + (1.0 - p) * jnp.log(1.0 - p)) * (
        DROPOUT_REGULARIZER * d_in)
    return out, weights_reg + dropout_reg


def _reference(x, unif_noise, weight, bias, p_logit):
    """Plain-JAX port of ConcreteDropout.forward with a Linear layer (f32)."""
    p = jax.nn.sigmoid(p_logit.reshape(()))
    drop_prob = jax.nn.sigmoid(
        (jnp.log(p + _EPS) - jnp.log(1.0 - p + _EPS)
         + jnp.log(unif_noise + _EPS) - jnp.log(1.0 - unif_noise + _EPS)) / _TEMP)
    x_d = x * (1.0 - drop_prob) / (1.0 - p)
    out = x_d @ weight + bias[None, :]
    sum_sq = jnp.sum(weight ** 2) + jnp.sum(bias ** 2)
    wr = WEIGHT_REGULARIZER * sum_sq / (1.0 - p)
    dr = (p * jnp.log(p) + (1.0 - p) * jnp.log(1.0 - p)) * (
        DROPOUT_REGULARIZER * x.shape[1])
    return out, wr + dr


if __name__ == "__main__":
    batch, d_in, d_out = 128, 256, 128
    tm, tk, tn = 64, 128, 128   # mask grid (2,2); matmul grid (2,1,2)

    key = jax.random.PRNGKey(0)
    kx, kw, kb, kn = jax.random.split(key, 4)
    x = jax.random.normal(kx, (batch, d_in), dtype=jnp.float32)
    weight = 0.05 * jax.random.normal(kw, (d_in, d_out), dtype=jnp.float32)
    bias = 0.01 * jax.random.normal(kb, (d_out,), dtype=jnp.float32)
    # p_logit init: uniform(logit(0.1), logit(0.1)) is deterministic.
    p_logit = jnp.array([math.log(INIT_MIN) - math.log(1.0 - INIT_MIN)],
                        dtype=jnp.float32)

    out, reg = concrete_dropout_forward(x, weight, bias, p_logit, rng_key=kn,
                                        tm=tm, tk=tk, tn=tn)
    jax.block_until_ready((out, reg))

    # Reference uses the identical noise (regenerated from the same key).
    u = jax.random.uniform(kn, (batch, d_in), dtype=jnp.float32)
    ref_out, ref_reg = _reference(x, u, weight, bias, p_logit)

    # bf16-MXU tolerance on the matmul output; regularizer path is pure f32.
    assert jnp.allclose(out, ref_out, atol=3e-2, rtol=3e-2), "output mismatch"
    assert jnp.allclose(reg, ref_reg, atol=1e-6, rtol=1e-5), "regularizer mismatch"

    print("KERNEL_OK")
</pallas_src>

<mosaic_0001>
module attributes {stable_mosaic.version = 11 : i64} {
  func.func @_concrete_dropout_mask_kernel(%arg0: i32, %arg1: i32, %arg2: memref<2xf32, #tpu.memory_space<smem>>, %arg3: memref<64x128xf32, #tpu.memory_space<vmem>>, %arg4: memref<64x128xf32, #tpu.memory_space<vmem>>, %arg5: memref<64x128xbf16, #tpu.memory_space<vmem>>) attributes {dimension_semantics = [#tpu.dimension_semantics<parallel>, #tpu.dimension_semantics<parallel>], iteration_bounds = array<i64: 2, 2>, scalar_prefetch = 1 : i64, scratch_operands = 0 : i64, tpu.core_type = #tpu.core_type<tc>, window_params = [{transform_indices = @transform_0, window_bounds = array<i64: 64, 128>}, {transform_indices = @transform_1, window_bounds = array<i64: 64, 128>}, {transform_indices = @transform_2, window_bounds = array<i64: 64, 128>}]} {
    %c0 = arith.constant 0 : index
    %0 = memref.load %arg2[%c0] : memref<2xf32, #tpu.memory_space<smem>>
    %c1 = arith.constant 1 : index
    %1 = memref.load %arg2[%c1] : memref<2xf32, #tpu.memory_space<smem>>
    %c0_0 = arith.constant 0 : index
    %c0_1 = arith.constant 0 : index
    %2 = vector.load %arg4[%c0_0, %c0_1] : memref<64x128xf32, #tpu.memory_space<vmem>>, vector<64x128xf32>
    %cst = arith.constant 1.000000e-07 : f32
    %3 = vector.broadcast %cst : f32 to vector<64x128xf32>
    %4 = arith.addf %2, %3 : vector<64x128xf32>
    %cst_2 = arith.constant 1.000000e+00 : f32
    %5 = vector.broadcast %cst_2 : f32 to vector<64x128xf32>
    %6 = arith.subf %5, %2 : vector<64x128xf32>
    %cst_3 = arith.constant 1.000000e-07 : f32
    %7 = vector.broadcast %cst_3 : f32 to vector<64x128xf32>
    %8 = arith.addf %6, %7 : vector<64x128xf32>
    %9 = arith.mulf %4, %4 : vector<64x128xf32>
    %10 = arith.mulf %9, %9 : vector<64x128xf32>
    %11 = arith.mulf %10, %4 : vector<64x128xf32>
    %12 = arith.mulf %11, %11 : vector<64x128xf32>
    %13 = arith.mulf %8, %8 : vector<64x128xf32>
    %14 = arith.mulf %13, %13 : vector<64x128xf32>
    %15 = arith.mulf %14, %8 : vector<64x128xf32>
    %16 = arith.mulf %15, %15 : vector<64x128xf32>
    %17 = vector.broadcast %0 : f32 to vector<64x128xf32>
    %18 = arith.mulf %17, %12 : vector<64x128xf32>
    %19 = arith.addf %16, %18 : vector<64x128xf32>
    %20 = arith.divf %16, %19 : vector<64x128xf32>
    %c0_4 = arith.constant 0 : index
    %c0_5 = arith.constant 0 : index
    %21 = vector.load %arg3[%c0_4, %c0_5] : memref<64x128xf32, #tpu.memory_space<vmem>>, vector<64x128xf32>
    %22 = vector.broadcast %1 : f32 to vector<64x128xf32>
    %23 = arith.mulf %20, %22 : vector<64x128xf32>
    %24 = arith.mulf %21, %23 : vector<64x128xf32>
    %25 = arith.truncf %24 : vector<64x128xf32> to vector<64x128xbf16>
    %c0_6 = arith.constant 0 : index
    %c0_7 = arith.constant 0 : index
    %26 = vector.load %arg5[%c0_6, %c0_7] : memref<64x128xbf16, #tpu.memory_space<vmem>>, vector<64x128xbf16>
    tpu.vector_store %arg5[%c0_6, %c0_7], %25 {strides = array<i32>} : memref<64x128xbf16, #tpu.memory_space<vmem>>, vector<64x128xbf16>,
    return
  }
  func.func @transform_0(%arg0: i32, %arg1: i32, %arg2: memref<2xf32, #tpu.memory_space<smem>>) -> (i32, i32) {
    %c0_i32 = arith.constant 0 : i32
    return %arg0, %arg1 : i32, i32
  }
  func.func @transform_1(%arg0: i32, %arg1: i32, %arg2: memref<2xf32, #tpu.memory_space<smem>>) -> (i32, i32) {
    %c0_i32 = arith.constant 0 : i32
    return %arg0, %arg1 : i32, i32
  }
  func.func @transform_2(%arg0: i32, %arg1: i32, %arg2: memref<2xf32, #tpu.memory_space<smem>>) -> (i32, i32) {
    %c0_i32 = arith.constant 0 : i32
    return %arg0, %arg1 : i32, i32
  }
}

</mosaic_0001>

<llo_original>
// kernel: tpu_custom_call.1
$region0: #{tpu_custom_call.1}
  #allocation0 [shape = 'u32[]', space=smem, size = 0x4, offset = 0x4, fixed_abs, tag = 'smem constant byte address 0x4 - core index']
  #allocation1 [shape = 'u32[144,128]{1,0:T(1,128)}', space=vmem, size = 0x12000, scoped, tag = 'internal scratch']
  #allocation2 [shape = 's32[1]{0}', space=sflag, size = 0x4, scoped, tag = 'scoped memory for tpu_custom_call.1']
  #allocation3 [shape = 'u8[512]{0}', space=smem, size = 0x200, scoped, tag = 'prefetched SMEM operand 0']
  %s0 = inlined_call_operand.hbm [shape: f32[2], index: 0, kind: input, shape index: {}]
  %s1 = inlined_call_operand.hbm [shape: f32[128,256], index: 1, kind: input, shape index: {}]
  %s2 = inlined_call_operand.hbm [shape: f32[128,256], index: 2, kind: input, shape index: {}]
  %s3 = inlined_call_operand.hbm [shape: bf16[128,256], index: 3, kind: output, shape index: {}]
  %s4 = sld [smem:[#allocation0]]
  $region49: #{tpu_custom_call.1} parent=0
    _
  %s6 = ssub.s32 1, %s4
  %s7 = scalar_select 0, %s6, %s4
  %9 = dma.hbm_to_smem %s0, 16, [#allocation3], [#allocation2]
  %10 = dma.done [#allocation2], 16
  %11 = sfence
  $region1: #{tpu_custom_call.1} parent=0
    #allocation4 [shape = 'u8[65536]{0}', space=vmem, size = 0x10000, scoped, tag = 'input window, operand 1']
    #allocation5 [shape = 's32[2]{0}', space=sflag, size = 0x8, scoped, tag = 'scoped memory for tpu_custom_call.1']
    #allocation6 [shape = 's32[2]{0}', space=sflag, size = 0x8, scoped, tag = 'scoped memory for tpu_custom_call.1']
    #allocation7 [shape = 'u8[65536]{0}', space=vmem, size = 0x10000, scoped, tag = 'input window, operand 2']
    #allocation8 [shape = 's32[2]{0}', space=sflag, size = 0x8, scoped, tag = 'scoped memory for tpu_custom_call.1']
    #allocation9 [shape = 'u8[32768]{0}', space=vmem, size = 0x8000, scoped, tag = 'output window, operand 0']
    %12 = vsyncpa [#allocation5], 0
    %s13 = scalar_lea.sflag [#allocation5], 1
    %14 = vsyncpa %s13, 0
    %15 = vsyncpa [#allocation8], 0
    %s16 = scalar_lea.sflag [#allocation8], 1
    %17 = vsyncpa %s16, 0
    %18 = vsyncpa [#allocation6], 0
    %s19 = scalar_lea.sflag [#allocation6], 1
    %20 = vsyncpa %s19, 0
    loop: start=0, step=1, limit=6
    $region2: #{tpu_custom_call.1} parent=1 // loop_pre_header
      _
    $region3: #{tpu_custom_call.1} parent=1 // loop_header
      %s22 = sphi 0, %s26
      %p23 = scmp.ge.s32.totalorder %s22, 6
      %s29 = sphi 0, %s41
      %s30 = sphi 0, %s37
      %s31 = sphi 0, %s29
      %s32 = sphi 0, %s30
      %s33 = sphi 0, %s31
      %s34 = sphi 0, %s32
      %s46 = sphi 0, %s48
      %s49 = sphi 0, %s46
      %s50 = sphi 0, %s49
      %s66 = sphi 0, %s50
      %s74 = sphi 0, %s76
      %s77 = sphi 0, %s74
      %s78 = sphi 0, %s77
      %s94 = sphi 0, %s78
      %s102 = sphi 0, %s104
      %s105 = sphi 0, %s102
      %s106 = sphi 0, %s105
      %s122 = sphi 0, %s106
    $region4: #{tpu_custom_call.1} parent=1 // loop_header_branch
      %25 = sbr.rel (%p23) target = $region8
    $region5: #{tpu_custom_call.1} parent=1 // loop_body
      %s27 = ssub.s32 %s22, 1
      %s28 = ssub.s32 %s22, 2
      %s35 = sadd.s32 1, %s30
      %p36 = scmp.ge.s32.totalorder %s35, 2
      %s37 = scalar_select %p36, 0, %s35
      %s38 = sadd.s32 1, %s29
      %s39 = scalar_select %p36, %s38, %s29
      %p40 = scmp.ge.s32.totalorder %s39, 2
      %s41 = scalar_select %p40, 0, %s39
      %s42 = ssub.s32 %s29, %s41
      %s43 = ssub.s32 %s30, %s37
      %s44 = sor.u32 %s42, %s43
      %p45 = scmp.eq.s32.totalorder %s44, 0
      %s47 = sadd.s32 %s46, 1
      %s48 = scalar_select %p45, %s46, %s47
      %p51 = pneg %p45
      %p52 = scmp.eq.s32.totalorder %s22, 3
      %p53 = por %p51, %p52
      %p54 = scmp.ne.s32.totalorder %s46, %s49
      %p55 = scmp.eq.s32.totalorder %s22, 0
      %p56 = por %p54, %p55
      %p57 = scmp.ne.s32.totalorder %s46, %s49
      %p58 = scmp.eq.s32.totalorder %s27, 3
      %p59 = por %p57, %p58
      %p60 = scmp.ne.s32.totalorder %s49, %s50
      %p61 = scmp.eq.s32.totalorder %s27, 0
      %p62 = por %p60, %p61
      %p63 = scmp.ne.s32.totalorder %s49, %s50
      %p64 = scmp.eq.s32.totalorder %s28, 3
      %p65 = por %p63, %p64
      %p67 = scmp.ne.s32.totalorder %s50, %s66
      %p68 = scmp.eq.s32.totalorder %s28, 0
      %p69 = por %p67, %p68
      %s70 = ssub.s32 %s29, %s41
      %s71 = ssub.s32 %s30, %s37
      %s72 = sor.u32 %s70, %s71
      %p73 = scmp.eq.s32.totalorder %s72, 0
      %s75 = sadd.s32 %s74, 1
      %s76 = scalar_select %p73, %s74, %s75
      %p79 = pneg %p73
      %p80 = scmp.eq.s32.totalorder %s22, 3
      %p81 = por %p79, %p80
      %p82 = scmp.ne.s32.totalorder %s74, %s77
      %p83 = scmp.eq.s32.totalorder %s22, 0
      %p84 = por %p82, %p83
      %p85 = scmp.ne.s32.totalorder %s74, %s77
      %p86 = scmp.eq.s32.totalorder %s27, 3
      %p87 = por %p85, %p86
      %p88 = scmp.ne.s32.totalorder %s77, %s78
      %p89 = scmp.eq.s32.totalorder %s27, 0
      %p90 = por %p88, %p89
      %p91 = scmp.ne.s32.totalorder %s77, %s78
      %p92 = scmp.eq.s32.totalorder %s28, 3
      %p93 = por %p91, %p92
      %p95 = scmp.ne.s32.totalorder %s78, %s94
      %p96 = scmp.eq.s32.totalorder %s28, 0
      %p97 = por %p95, %p96
      %s98 = ssub.s32 %s29, %s41
      %s99 = ssub.s32 %s30, %s37
      %s100 = sor.u32 %s98, %s99
      %p101 = scmp.eq.s32.totalorder %s100, 0
      %s103 = sadd.s32 %s102, 1
      %s104 = scalar_select %p101, %s102, %s103
      %p107 = pneg %p101
      %p108 = scmp.eq.s32.totalorder %s22, 3
      %p109 = por %p107, %p108
      %p110 = scmp.ne.s32.totalorder %s102, %s105
      %p111 = scmp.eq.s32.totalorder %s22, 0
      %p112 = por %p110, %p111
      %p113 = scmp.ne.s32.totalorder %s102, %s105
      %p114 = scmp.eq.s32.totalorder %s27, 3
      %p115 = por %p113, %p114
      %p116 = scmp.ne.s32.totalorder %s105, %s106
      %p117 = scmp.eq.s32.totalorder %s27, 0
      %p118 = por %p116, %p117
      %p119 = scmp.ne.s32.totalorder %s105, %s106
      %p120 = scmp.eq.s32.totalorder %s28, 3
      %p121 = por %p119, %p120
      %p123 = scmp.ne.s32.totalorder %s106, %s122
      %p124 = scmp.eq.s32.totalorder %s28, 0
      %p125 = por %p123, %p124
      %p126 = scmp.le.s32.totalorder 1, %s22
      %p127 = scmp.lt.s32.totalorder %s22, 5
      %p128 = pnand %p126, %p127
      %p129 = pneg %p128
      // Predicated region
      $region9: #{tpu_custom_call.1} parent=5 // pred_check
        _
      $region10: #{tpu_custom_call.1} parent=5 // pred_check_branch
        %131 = sbr.rel (%p128) target = $region12
      $region11: #{tpu_custom_call.1} parent=5 // pred_region
        %s132 = ssub.s32 %s22, 1
      $region12: #{tpu_custom_call.1} parent=5 // pred_fallthru
        _
      %p133 = scmp.lt.s32.totalorder %s22, 4
      // Predicated region
      $region13: #{tpu_custom_call.1} parent=5 // pred_check
        %p134 = pneg %p133
      $region14: #{tpu_custom_call.1} parent=5 // pred_check_branch
        %136 = sbr.rel (%p134) target = $region16
      $region15: #{tpu_custom_call.1} parent=5 // pred_region
        // Predicated region
        $region17: #{tpu_custom_call.1} parent=15 // pred_check
          %p137 = pneg %p56
        $region18: #{tpu_custom_call.1} parent=15 // pred_check_branch
          %139 = sbr.rel (%p137) target = $region20
        $region19: #{tpu_custom_call.1} parent=15 // pred_region
          %s140 = sand.u32 %s46, 1
          %s141 = scalar_lea.sflag [#allocation5], %s140
          %s142 = sand.u32 %s46, 1
          %s143 = smul.addr %s142, 64
          %s144 = scalar_lea.vmem [#allocation4], %s143
          %s145 = smul.u32 8, %s29
          %s147 = ssub.s32 1024, 1024
          %148 = vsyncadd %s141, %s147
          %s149 = smul.addr %s145, 2
          %s150 = sadd.s32 %s30, %s149
          %s151 = smul.addr %s150, 128
          %s152 = scalar_lea.hbm %s1, %s151
          %s153 = sshll.u32 %s144, 4
          %s154 = int_to_ptr.vmem [resolvable:$true] %s153
          %159 = dma.hbm_to_vmem [thread:$0]  %s152, 1024, %s154, %s141, 256, 128, 8
        $region20: #{tpu_custom_call.1} parent=15 // pred_fallthru
          _
        // Predicated region
        $region21: #{tpu_custom_call.1} parent=15 // pred_check
          %p160 = pneg %p84
        $region22: #{tpu_custom_call.1} parent=15 // pred_check_branch
          %162 = sbr.rel (%p160) target = $region24
        $region23: #{tpu_custom_call.1} parent=15 // pred_region
          %s163 = sand.u32 %s74, 1
          %s164 = scalar_lea.sflag [#allocation8], %s163
          %s165 = sand.u32 %s74, 1
          %s166 = smul.addr %s165, 64
          %s167 = scalar_lea.vmem [#allocation7], %s166
          %s168 = smul.u32 8, %s29
          %s170 = ssub.s32 1024, 1024
          %171 = vsyncadd %s164, %s170
          %s172 = smul.addr %s168, 2
          %s173 = sadd.s32 %s30, %s172
          %s174 = smul.addr %s173, 128
          %s175 = scalar_lea.hbm %s2, %s174
          %s176 = sshll.u32 %s167, 4
          %s177 = int_to_ptr.vmem [resolvable:$true] %s176
          %182 = dma.hbm_to_vmem [thread:$0]  %s175, 1024, %s177, %s164, 256, 128, 8
        $region24: #{tpu_custom_call.1} parent=15 // pred_fallthru
          _
      $region16: #{tpu_custom_call.1} parent=5 // pred_fallthru
        _
      %p183 = scmp.le.s32.totalorder 1, %s22
      %p184 = scmp.lt.s32.totalorder %s22, 5
      %p185 = pnand %p183, %p184
      %p186 = pneg %p185
      // Predicated region
      $region25: #{tpu_custom_call.1} parent=5 // pred_check
        _
      $region26: #{tpu_custom_call.1} parent=5 // pred_check_branch
        %188 = sbr.rel (%p185) target = $region28
      $region27: #{tpu_custom_call.1} parent=5 // pred_region
        %s189 = ssub.s32 %s22, 1
        %s190 = sand.u32 %s49, 1
        %s191 = scalar_lea.sflag [#allocation5], %s190
        %s192 = sand.u32 %s49, 1
        %s193 = smul.addr %s192, 64
        %s194 = scalar_lea.vmem [#allocation4], %s193
        // Predicated region
        $region29: #{tpu_custom_call.1} parent=27 // pred_check
          %p195 = pneg %p62
        $region30: #{tpu_custom_call.1} parent=27 // pred_check_branch
          %197 = sbr.rel (%p195) target = $region32
        $region31: #{tpu_custom_call.1} parent=27 // pred_region
          %198 = dma.done %s191, 1024
        $region32: #{tpu_custom_call.1} parent=27 // pred_fallthru
          _
        %s199 = sand.u32 %s77, 1
        %s200 = scalar_lea.sflag [#allocation8], %s199
        %s201 = sand.u32 %s77, 1
        %s202 = smul.addr %s201, 64
        %s203 = scalar_lea.vmem [#allocation7], %s202
        // Predicated region
        $region33: #{tpu_custom_call.1} parent=27 // pred_check
          %p204 = pneg %p90
        $region34: #{tpu_custom_call.1} parent=27 // pred_check_branch
          %206 = sbr.rel (%p204) target = $region36
        $region35: #{tpu_custom_call.1} parent=27 // pred_region
          %207 = dma.done %s200, 1024
        $region36: #{tpu_custom_call.1} parent=27 // pred_fallthru
          _
        %s208 = sand.u32 %s49, 1
        %s209 = scalar_lea.sflag [#allocation5], %s208
        %s210 = sand.u32 %s49, 1
        %s211 = smul.addr %s210, 64
        %s212 = scalar_lea.vmem [#allocation4], %s211
        %p213 = pneg %p62
        %p214 = pneg %p59
        %s215 = sand.u32 %s77, 1
        %s216 = scalar_lea.sflag [#allocation8], %s215
        %s217 = sand.u32 %s77, 1
        %s218 = smul.addr %s217, 64
        %s219 = scalar_lea.vmem [#allocation7], %s218
        %p220 = pneg %p90
        %p221 = pneg %p87
        %p222 = pneg %p118
        %p223 = pneg %p115
        %s224 = sand.u32 %s105, 1
        %s225 = scalar_lea.sflag [#allocation6], %s224
        %s226 = sand.u32 %s105, 1
        %s227 = smul.addr %s226, 32
        %s228 = scalar_lea.vmem [#allocation9], %s227
        %s229 = smul.u32 8, %s31
        %s230 = smul.u32 8, %s31
        %s231 = smul.u32 8, %s31
        %s232 = sld [smem:[#allocation3]]
        %s233 = sld [smem:[#allocation3 + $0x1]]
        %v234 = vld [vmem:[%s203] sm:$0xff]
        %v235 = vld [vmem:[%s203 + $0x8] sm:$0xff]
        %v236 = vld [vmem:[%s203 + $0x10] sm:$0xff]
        %v237 = vld [vmem:[%s203 + $0x18] sm:$0xff]
        %v238 = vld [vmem:[%s203 + $0x20] sm:$0xff]
        %v239 = vld [vmem:[%s203 + $0x28] sm:$0xff]
        %v240 = vld [vmem:[%s203 + $0x30] sm:$0xff]
        %v241 = vld [vmem:[%s203 + $0x38] sm:$0xff]
        %v242 = vadd.f32 %v234, 1e-07
        %v243 = vadd.f32 %v235, 1e-07
        %v244 = vadd.f32 %v236, 1e-07
        %v245 = vadd.f32 %v237, 1e-07
        %v246 = vadd.f32 %v238, 1e-07
        %v247 = vadd.f32 %v239, 1e-07
        %v248 = vadd.f32 %v240, 1e-07
        %v249 = vadd.f32 %v241, 1e-07
        %v250 = vsub.f32 1.0, %v234
        %v251 = vsub.f32 1.0, %v235
        %v252 = vsub.f32 1.0, %v236
        %v253 = vsub.f32 1.0, %v237
        %v254 = vsub.f32 1.0, %v238
        %v255 = vsub.f32 1.0, %v239
        %v256 = vsub.f32 1.0, %v240
        %v257 = vsub.f32 1.0, %v241
        %v258 = vadd.f32 %v250, 1e-07
        %v259 = vadd.f32 %v251, 1e-07
        %v260 = vadd.f32 %v252, 1e-07
        %v261 = vadd.f32 %v253, 1e-07
        %v262 = vadd.f32 %v254, 1e-07
        %v263 = vadd.f32 %v255, 1e-07
        %v264 = vadd.f32 %v256, 1e-07
        %v265 = vadd.f32 %v257, 1e-07
        %v266 = vmul.f32 %v242, %v242
        %v267 = vmul.f32 %v243, %v243
        %v268 = vmul.f32 %v244, %v244
        %v269 = vmul.f32 %v245, %v245
        %v270 = vmul.f32 %v246, %v246
        %v271 = vmul.f32 %v247, %v247
        %v272 = vmul.f32 %v248, %v248
        %v273 = vmul.f32 %v249, %v249
        %v274 = vmul.f32 %v266, %v266
        %v275 = vmul.f32 %v267, %v267
        %v276 = vmul.f32 %v268, %v268
        %v277 = vmul.f32 %v269, %v269
        %v278 = vmul.f32 %v270, %v270
        %v279 = vmul.f32 %v271, %v271
        %v280 = vmul.f32 %v272, %v272
        %v281 = vmul.f32 %v273, %v273
        %v282 = vmul.f32 %v274, %v242
        %v283 = vmul.f32 %v275, %v243
        %v284 = vmul.f32 %v276, %v244
        %v285 = vmul.f32 %v277, %v245
        %v286 = vmul.f32 %v278, %v246
        %v287 = vmul.f32 %v279, %v247
        %v288 = vmul.f32 %v280, %v248
        %v289 = vmul.f32 %v281, %v249
        %v290 = vmul.f32 %v282, %v282
        %v291 = vmul.f32 %v283, %v283
        %v292 = vmul.f32 %v284, %v284
        %v293 = vmul.f32 %v285, %v285
        %v294 = vmul.f32 %v286, %v286
        %v295 = vmul.f32 %v287, %v287
        %v296 = vmul.f32 %v288, %v288
        %v297 = vmul.f32 %v289, %v289
        %v298 = vmul.f32 %v258, %v258
        %v299 = vmul.f32 %v259, %v259
        %v300 = vmul.f32 %v260, %v260
        %v301 = vmul.f32 %v261, %v261
        %v302 = vmul.f32 %v262, %v262
        %v303 = vmul.f32 %v263, %v263
        %v304 = vmul.f32 %v264, %v264
        %v305 = vmul.f32 %v265, %v265
        %v306 = vmul.f32 %v298, %v298
        %v307 = vmul.f32 %v299, %v299
        %v308 = vmul.f32 %v300, %v300
        %v309 = vmul.f32 %v301, %v301
        %v310 = vmul.f32 %v302, %v302
        %v311 = vmul.f32 %v303, %v303
        %v312 = vmul.f32 %v304, %v304
        %v313 = vmul.f32 %v305, %v305
        %v314 = vmul.f32 %v306, %v258
        %v315 = vmul.f32 %v307, %v259
        %v316 = vmul.f32 %v308, %v260
        %v317 = vmul.f32 %v309, %v261
        %v318 = vmul.f32 %v310, %v262
        %v319 = vmul.f32 %v311, %v263
        %v320 = vmul.f32 %v312, %v264
        %v321 = vmul.f32 %v313, %v265
        %v322 = vmul.f32 %v314, %v314
        %v323 = vmul.f32 %v315, %v315
        %v324 = vmul.f32 %v316, %v316
        %v325 = vmul.f32 %v317, %v317
        %v326 = vmul.f32 %v318, %v318
        %v327 = vmul.f32 %v319, %v319
        %v328 = vmul.f32 %v320, %v320
        %v329 = vmul.f32 %v321, %v321
        %v330 = vstv %s232
        %v331 = vmul.f32 %v330, %v290
        %v332 = vmul.f32 %v330, %v291
        %v333 = vmul.f32 %v330, %v292
        %v334 = vmul.f32 %v330, %v293
        %v335 = vmul.f32 %v330, %v294
        %v336 = vmul.f32 %v330, %v295
        %v337 = vmul.f32 %v330, %v296
        %v338 = vmul.f32 %v330, %v297
        %v339 = vadd.f32 %v322, %v331
        %v340 = vadd.f32 %v323, %v332
        %v341 = vadd.f32 %v324, %v333
        %v342 = vadd.f32 %v325, %v334
        %v343 = vadd.f32 %v326, %v335
        %v344 = vadd.f32 %v327, %v336
        %v345 = vadd.f32 %v328, %v337
        %v346 = vadd.f32 %v329, %v338
        %v347 = vrcp.pop %v339
        %v348 = vmul.f32 %v322, %v347
        %v349 = vrcp.pop %v340
        %v350 = vmul.f32 %v323, %v349
        %v351 = vrcp.pop %v341
        %v352 = vmul.f32 %v324, %v351
        %v353 = vrcp.pop %v342
        %v354 = vmul.f32 %v325, %v353
        %v355 = vrcp.pop %v343
        %v356 = vmul.f32 %v326, %v355
        %v357 = vrcp.pop %v344
        %v358 = vmul.f32 %v327, %v357
        %v359 = vrcp.pop %v345
        %v360 = vmul.f32 %v328, %v359
        %v361 = vrcp.pop %v346
        %v362 = vmul.f32 %v329, %v361
        %v363 = vld [vmem:[%s194] sm:$0xff]
        %v364 = vld [vmem:[%s194 + $0x8] sm:$0xff]
        %v365 = vld [vmem:[%s194 + $0x10] sm:$0xff]
        %v366 = vld [vmem:[%s194 + $0x18] sm:$0xff]
        %v367 = vld [vmem:[%s194 + $0x20] sm:$0xff]
        %v368 = vld [vmem:[%s194 + $0x28] sm:$0xff]
        %v369 = vld [vmem:[%s194 + $0x30] sm:$0xff]
        %v370 = vld [vmem:[%s194 + $0x38] sm:$0xff]
        %v371 = vstv %s233
        %v372 = vmul.f32 %v348, %v371
        %v373 = vmul.f32 %v350, %v371
        %v374 = vmul.f32 %v352, %v371
        %v375 = vmul.f32 %v354, %v371
        %v376 = vmul.f32 %v356, %v371
        %v377 = vmul.f32 %v358, %v371
        %v378 = vmul.f32 %v360, %v371
        %v379 = vmul.f32 %v362, %v371
        %v380 = vmul.f32 %v363, %v372
        %v381 = vmul.f32 %v364, %v373
        %v382 = vmul.f32 %v365, %v374
        %v383 = vmul.f32 %v366, %v375
        %v384 = vmul.f32 %v367, %v376
        %v385 = vmul.f32 %v368, %v377
        %v386 = vmul.f32 %v369, %v378
        %v387 = vmul.f32 %v370, %v379
        %v388 = vpack.c.bf16 %v381, %v380
        %v389 = vpack.c.bf16 %v383, %v382
        %v390 = vpack.c.bf16 %v385, %v384
        %v391 = vpack.c.bf16 %v387, %v386
        %v396 = vunpack.c.l.b16 %v388
        %v397 = vunpack.c.h.b16 %v388
        %v398 = vunpack.c.l.b16 %v389
        %v399 = vunpack.c.h.b16 %v389
        %v400 = vunpack.c.l.b16 %v390
        %v401 = vunpack.c.h.b16 %v390
        %v402 = vunpack.c.l.b16 %v391
        %v403 = vunpack.c.h.b16 %v391
        %v404 = vpack.c.b16 %v396, %v396
        %v405 = vpack.c.b16 %v397, %v397
        %v406 = vpack.c.b16 %v398, %v398
        %v407 = vpack.c.b16 %v399, %v399
        %v408 = vpack.c.b16 %v400, %v400
        %v409 = vpack.c.b16 %v401, %v401
        %v410 = vpack.c.b16 %v402, %v402
        %v411 = vpack.c.b16 %v403, %v403
        %420 = vst [vmem:[%s228] sm:$0xf] %v404
        %421 = vst [vmem:[%s228 + $0x4] sm:$0xf] %v405
        %422 = vst [vmem:[%s228 + $0x8] sm:$0xf] %v406
        %423 = vst [vmem:[%s228 + $0xc] sm:$0xf] %v407
        %424 = vst [vmem:[%s228 + $0x10] sm:$0xf] %v408
        %425 = vst [vmem:[%s228 + $0x14] sm:$0xf] %v409
        %426 = vst [vmem:[%s228 + $0x18] sm:$0xf] %v410
        %427 = vst [vmem:[%s228 + $0x1c] sm:$0xf] %v411
        %s428 = sand.u32 %s105, 1
        %s429 = scalar_lea.sflag [#allocation6], %s428
        %s430 = sand.u32 %s105, 1
        %s431 = smul.addr %s430, 32
        %s432 = scalar_lea.vmem [#allocation9], %s431
        // Predicated region
        $region37: #{tpu_custom_call.1} parent=27 // pred_check
          %p433 = pneg %p115
        $region38: #{tpu_custom_call.1} parent=27 // pred_check_branch
          %435 = sbr.rel (%p433) target = $region40
        $region39: #{tpu_custom_call.1} parent=27 // pred_region
          %s436 = smul.u32 8, %s31
          %s438 = ssub.s32 512, 512
          %439 = vsyncadd %s429, %s438
          %s440 = smul.addr %s436, 2
          %s441 = sadd.s32 %s32, %s440
          %s442 = smul.addr %s441, 64
          %s443 = scalar_lea.hbm %s3, %s442
          %s444 = sshll.u32 %s432, 4
          %s445 = int_to_ptr.vmem [resolvable:$true] %s444
          %450 = dma.vmem_to_hbm [thread:$0]  %s445, 512, %s443, %s429, 64, 128, 4
        $region40: #{tpu_custom_call.1} parent=27 // pred_fallthru
          _
      $region28: #{tpu_custom_call.1} parent=5 // pred_fallthru
        _
      %p451 = scmp.le.s32.totalorder 2, %s22
      // Predicated region
      $region41: #{tpu_custom_call.1} parent=5 // pred_check
        %p452 = pneg %p451
      $region42: #{tpu_custom_call.1} parent=5 // pred_check_branch
        %454 = sbr.rel (%p452) target = $region44
      $region43: #{tpu_custom_call.1} parent=5 // pred_region
        %s455 = ssub.s32 %s22, 2
        // Predicated region
        $region45: #{tpu_custom_call.1} parent=43 // pred_check
          %p456 = pneg %p121
        $region46: #{tpu_custom_call.1} parent=43 // pred_check_branch
          %458 = sbr.rel (%p456) target = $region48
        $region47: #{tpu_custom_call.1} parent=43 // pred_region
          %s459 = sand.u32 %s106, 1
          %s460 = scalar_lea.sflag [#allocation6], %s459
          %s461 = sand.u32 %s106, 1
          %s462 = smul.addr %s461, 32
          %s463 = scalar_lea.vmem [#allocation9], %s462
          %464 = dma.done %s460, 512
        $region48: #{tpu_custom_call.1} parent=43 // pred_fallthru
          _
      $region44: #{tpu_custom_call.1} parent=5 // pred_fallthru
        _
    $region6: #{tpu_custom_call.1} parent=1 // loop_footer
      %s26 = sadd.s32 1, %s22
    $region7: #{tpu_custom_call.1} parent=1 // loop_footer_branch
      %21 = sbr.rel target = $region3
    $region8: #{tpu_custom_call.1} parent=1 // loop_exit
      _
    %465 = vsyncpa [#allocation5], 1
    %s466 = scalar_lea.sflag [#allocation5], 1
    %467 = vsyncpa %s466, 1
    %468 = vsyncpa [#allocation8], 1
    %s469 = scalar_lea.sflag [#allocation8], 1
    %470 = vsyncpa %s469, 1
    %471 = vsyncpa [#allocation6], 1
    %s472 = scalar_lea.sflag [#allocation6], 1
    %473 = vsyncpa %s472, 1

</llo_original>
